<compile_context>
chip_gen: v7x
topology: tpu7x:2x2x1
jax: 0.10.0
libtpu: 0.0.40
codegen_flags: <defaults>
</compile_context>

<pallas_src>
import numpy as np
import jax
import jax.numpy as jnp
from jax import lax
from jax.experimental import pallas as pl
from jax.experimental.pallas import tpu as pltpu


# -----------------------------------------------------------------------------
# deterministic parameter init (mirrors Communication.init_gaussian_filter)
# -----------------------------------------------------------------------------
def make_gaussian_1d(k_size=5, sigma=1.0):
    """1D factor g1 such that outer(g1, g1) == 1/(2*pi*sigma) *
    exp(-(x^2+y^2)/(2*sigma^2)), i.e. exactly the module's 2D kernel."""
    center = k_size // 2
    i = np.arange(k_size) - center
    return (np.sqrt(1.0 / (2.0 * np.pi * sigma))
            * np.exp(-np.square(i) / (2.0 * np.square(sigma)))).astype(np.float32)


# -----------------------------------------------------------------------------
# fused kernel
# -----------------------------------------------------------------------------
def build_fused_kernel(g1, threshold, L, H, W, HW, HWp, Nb):
    K = len(g1)
    P = (K - 1) // 2
    g = [float(v) for v in g1]              # baked-in f32 coefficients
    w_pow2 = (W & (W - 1)) == 0
    w_shift = int(round(np.log2(W))) if w_pow2 else None

    def kernel(conf_ref, x_ref, out_ref, sum_ref):
        # conf_ref: (Nb, A,  HWp)      confidence maps
        # x_ref   : (Nb, Ct, HWp)      feature tile
        # out_ref : (Nb, 2,  Ct, HWp)  duplicated masked features
        # sum_ref : (1, 1)             per-(agent block) raw-mask sum
        f32 = jnp.float32

        # flat pixel index -> (row, col), generated in-kernel (no HBM input)
        flat = lax.broadcasted_iota(jnp.int32, (1, HWp), 1)
        if w_pow2:
            row = flat >> w_shift
            col = flat & (W - 1)
        else:
            row = flat // W
            col = flat % W

        # confidence: max over anchors first, sigmoid once (monotonic => same)
        conf = conf_ref[...].astype(f32)                       # (Nb, A, HWp)
        cm = jax.nn.sigmoid(jnp.max(conf, axis=1))             # (Nb, HWp)

        # separable gaussian: XLU lane rolls + boundary (zero-padding) masks
        def sep_pass(plane, stride, limit, idx):
            acc = g[P] * plane
            for k in range(K):
                s = k - P
                if s == 0:
                    continue
                # value at flat index i + s*stride  (circular wrap is masked off)
                shifted = pltpu.roll(plane, shift=(-s * stride) % HWp, axis=1)
                valid = (idx < (limit - s)) if s > 0 else (idx >= (-s))
                acc = acc + g[k] * jnp.where(valid, shifted, 0.0)
            return acc

        t = sep_pass(cm, W, H, row)      # vertical pass  (rows, zero padded)
        sm = sep_pass(t, 1, W, col)      # horizontal pass (cols + row seam)

        mask_raw = (sm > threshold).astype(f32)                # (Nb, HWp)

        # communication-rate numerator (pre ego override); only the c==0 tile
        # contributes, other channel tiles write 0 so every block is written.
        counted = mask_raw if HWp == HW else jnp.where(flat < HW, mask_raw, 0.0)
        s_blk = jnp.sum(counted, axis=(0, 1), keepdims=True)   # (1, 1)
        sum_ref[...] = s_blk * (pl.program_id(1) == 0).astype(f32)

        # ego agent (index 0 of each group of L) gets an all-ones mask
        agent = (pl.program_id(0) * Nb
                 + lax.broadcasted_iota(jnp.int32, (Nb, HWp), 0))
        mask = jnp.where((agent % L) == 0, 1.0, mask_raw)      # (Nb, HWp)

        # apply mask in x's dtype and duplicate along the size-2 axis
        xm = x_ref[...] * mask.astype(x_ref.dtype)[:, None, :]
        out_ref[:, 0] = xm
        out_ref[:, 1] = xm

    return kernel


# -----------------------------------------------------------------------------
# block-size heuristic (biggest tiles that fit a conservative VMEM budget)
# -----------------------------------------------------------------------------
_TARGET_STEP_BYTES = 12 * 2**20   # per-step working set; x2 for double buffering


def _pick_blocks(N, A, C, HWp, conf_itemsize, x_itemsize,
                 budget=_TARGET_STEP_BYTES):
    def divisors(n):
        return [d for d in range(n, 0, -1) if n % d == 0]

    # channel tiles must keep the sublane dim (8,128)-legal: Ct == C or Ct % 8 == 0
    c_cands = [c for c in divisors(C) if c == C or c % 8 == 0] or [C]
    for ct in c_cands:                                  # prefer big channel tiles
        for nb in divisors(N):                          # then as many agents as fit
            step = nb * HWp * (A * conf_itemsize + 3 * ct * x_itemsize)
            if step <= budget:
                return nb, ct
    return 1, c_cands[-1]


# -----------------------------------------------------------------------------
# forward (eval path, threshold != 0)
# -----------------------------------------------------------------------------
def communication_forward(x, batch_confidence_maps, threshold, g1, B):
    L_list = [int(c.shape[0]) for c in batch_confidence_maps]
    assert len(set(L_list)) == 1, "equal L per sample required (ego = index 0)"
    L = L_list[0]

    conf = jnp.concatenate(batch_confidence_maps, axis=0)      # (N, A, H, W)
    N, A, H, W = conf.shape
    Nx, C, Hx, Wx = x.shape
    assert Nx == N
    # TODO(synk): F.interpolate branch (x spatial != confidence spatial) not implemented.
    assert (Hx, Wx) == (H, W)

    HW = H * W
    HWp = ((HW + 127) // 128) * 128          # lane-dense padded plane length

    conf_flat = conf.reshape(N, A, HW)
    x_flat = x.reshape(N, C, HW)
    if HWp != HW:
        pad = HWp - HW
        conf_flat = jnp.pad(conf_flat, ((0, 0), (0, 0), (0, pad)))
        x_flat = jnp.pad(x_flat, ((0, 0), (0, 0), (0, pad)))

    Nb, Ct = _pick_blocks(N, A, C, HWp,
                          conf_flat.dtype.itemsize, x_flat.dtype.itemsize)
    Nn, Nc = N // Nb, C // Ct
    step_bytes = Nb * HWp * (A * conf_flat.dtype.itemsize
                             + 3 * Ct * x_flat.dtype.itemsize)
    vmem_limit = int(min(56 * 2**20, max(32 * 2**20, 3 * step_bytes)))

    kernel = build_fused_kernel(g1, threshold, L, H, W, HW, HWp, Nb)

    out4, sums = pl.pallas_call(
        kernel,
        out_shape=(jax.ShapeDtypeStruct((N, 2, C, HWp), x.dtype),
                   jax.ShapeDtypeStruct((Nn, Nc), jnp.float32)),
        grid=(Nn, Nc),
        in_specs=[pl.BlockSpec((Nb, A, HWp), lambda n, c: (n, 0, 0)),
                  pl.BlockSpec((Nb, Ct, HWp), lambda n, c: (n, c, 0))],
        out_specs=(pl.BlockSpec((Nb, 2, Ct, HWp), lambda n, c: (n, 0, c, 0)),
                   pl.BlockSpec((1, 1), lambda n, c: (n, c))),
        compiler_params=pltpu.CompilerParams(
            dimension_semantics=("parallel", "parallel"),
            vmem_limit_bytes=vmem_limit),
    )(conf_flat, x_flat)

    if HWp != HW:
        out4 = out4[..., :HW]
    out = out4.reshape(N, 2 * C, H, W)
    # equal L per sample => mean over samples of per-sample rates == total/(B*L*H*W)
    comm_rate = jnp.sum(sums) / (B * L * H * W)
    return out, comm_rate


# -----------------------------------------------------------------------------
# pure-JAX reference for verification (mirrors the torch module)
# -----------------------------------------------------------------------------
def reference_forward(x, batch_confidence_maps, threshold, g1, B):
    conf = jnp.concatenate(batch_confidence_maps, axis=0)
    N, A, H, W = conf.shape
    L = N // B
    cm = jnp.max(jax.nn.sigmoid(conf), axis=1, keepdims=True)         # (N,1,H,W)
    gk = jnp.asarray(np.outer(g1, g1), jnp.float32)[None, None]       # OIHW
    sm = lax.conv_general_dilated(cm.astype(jnp.float32), gk, (1, 1), "SAME",
                                  dimension_numbers=("NCHW", "OIHW", "NCHW"))
    mask = (sm > threshold).astype(jnp.float32)
    rates = mask.reshape(B, L, H * W).sum(axis=(1, 2)) / (L * H * W)
    rate = jnp.mean(rates)
    mask = mask.at[jnp.arange(B) * L].set(1.0)
    xm = x * mask
    return jnp.concatenate([xm, xm], axis=1), rate, sm


if __name__ == "__main__":
    B, L, A, C, H, W = 2, 2, 4, 8, 16, 16
    threshold = 0.6
    g1 = make_gaussian_1d(k_size=5, sigma=1.0)

    key = jax.random.PRNGKey(0)
    k1, k2 = jax.random.split(key)
    conf_all = jax.random.normal(k1, (B * L, A, H, W), dtype=jnp.float32) * 2.0
    batch_confidence_maps = [conf_all[b * L:(b + 1) * L] for b in range(B)]
    x = jax.random.normal(k2, (B * L, C, H, W), dtype=jnp.float32)

    out, rate = communication_forward(x, batch_confidence_maps, threshold, g1, B)
    out = jax.block_until_ready(out)
    rate = jax.block_until_ready(rate)

    ref_out, ref_rate, sm_ref = reference_forward(
        x, batch_confidence_maps, threshold, g1, B)

    # Pixels whose smoothed confidence sits within float noise of the threshold
    # can legally flip between the (mathematically identical) separable and 2D
    # conv formulations; exclude them from the comparison.
    out_np, ref_np = np.asarray(out), np.asarray(ref_out)
    border = np.abs(np.asarray(sm_ref) - threshold) < 1e-5            # (N,1,H,W)
    n_border = int(border.sum())
    ok = np.broadcast_to(~border, out_np.shape)
    np.testing.assert_allclose(np.where(ok, out_np, 0.0),
                               np.where(ok, ref_np, 0.0),
                               rtol=1e-4, atol=1e-5)
    rate_tol = n_border / (B * L * H * W) + 1e-6
    assert abs(float(rate) - float(ref_rate)) <= rate_tol, (float(rate),
                                                            float(ref_rate))

    print("KERNEL_OK")
</pallas_src>

<mosaic_0001>
module attributes {stable_mosaic.version = 11 : i64} {
  func.func @kernel(%arg0: i32, %arg1: i32, %arg2: memref<4x4x256xf32, #tpu.memory_space<vmem>>, %arg3: memref<4x8x256xf32, #tpu.memory_space<vmem>>, %arg4: memref<4x2x8x256xf32, #tpu.memory_space<vmem>>, %arg5: memref<1x1xf32, #tpu.memory_space<vmem>>) attributes {dimension_semantics = [#tpu.dimension_semantics<parallel>, #tpu.dimension_semantics<parallel>], iteration_bounds = array<i64: 1, 1>, scalar_prefetch = 0 : i64, scratch_operands = 0 : i64, tpu.core_type = #tpu.core_type<tc>, window_params = [{transform_indices = @transform_0, window_bounds = array<i64: 4, 4, 256>}, {transform_indices = @transform_1, window_bounds = array<i64: 4, 8, 256>}, {transform_indices = @transform_2, window_bounds = array<i64: 4, 2, 8, 256>}, {transform_indices = @transform_3, window_bounds = array<i64: 1, 1>}]} {
    %0 = tpu.iota {dimensions = array<i32: 1>} : vector<1x256xi32>
    %c4_i32 = arith.constant 4 : i32
    %1 = vector.broadcast %c4_i32 : i32 to vector<1x256xi32>
    %2 = arith.shrsi %0, %1 : vector<1x256xi32>
    %c15_i32 = arith.constant 15 : i32
    %3 = vector.broadcast %c15_i32 : i32 to vector<1x256xi32>
    %4 = arith.andi %0, %3 : vector<1x256xi32>
    %c0 = arith.constant 0 : index
    %c0_0 = arith.constant 0 : index
    %c0_1 = arith.constant 0 : index
    %5 = vector.load %arg2[%c0, %c0_0, %c0_1] : memref<4x4x256xf32, #tpu.memory_space<vmem>>, vector<4x4x256xf32>
    %cst = arith.constant dense<0xFF800000> : vector<4x256xf32>
    %6 = vector.multi_reduction <maximumf>, %5, %cst [1] : vector<4x4x256xf32> to vector<4x256xf32>
    %7 = arith.negf %6 : vector<4x256xf32>
    %8 = math.exp %7 : vector<4x256xf32>
    %cst_2 = arith.constant 1.000000e+00 : f32
    %9 = vector.broadcast %cst_2 : f32 to vector<4x256xf32>
    %10 = arith.addf %9, %8 : vector<4x256xf32>
    %11 = arith.divf %9, %10 : vector<4x256xf32>
    %cst_3 = arith.constant 0.398942292 : f32
    %12 = vector.broadcast %cst_3 : f32 to vector<4x256xf32>
    %13 = arith.mulf %12, %11 : vector<4x256xf32>
    %c32_i32 = arith.constant 32 : i32
    %14 = tpu.dynamic_rotate %11 by %c32_i32 dim 1 : vector<4x256xf32>, i32 -> vector<4x256xf32>
    %c2_i32 = arith.constant 2 : i32
    %15 = vector.broadcast %c2_i32 : i32 to vector<1x256xi32>
    %16 = arith.cmpi sge, %2, %15 : vector<1x256xi32>
    %cst_4 = arith.constant 0.000000e+00 : f32
    %17 = vector.shape_cast %16 : vector<1x256xi1> to vector<1x256xi1>
    %18 = vector.broadcast %17 : vector<1x256xi1> to vector<4x256xi1>
    %19 = vector.broadcast %cst_4 : f32 to vector<4x256xf32>
    %20 = arith.select %18, %14, %19 : vector<4x256xi1>, vector<4x256xf32>
    %cst_5 = arith.constant 0.0539909676 : f32
    %21 = vector.broadcast %cst_5 : f32 to vector<4x256xf32>
    %22 = arith.mulf %21, %20 : vector<4x256xf32>
    %23 = arith.addf %13, %22 : vector<4x256xf32>
    %c16_i32 = arith.constant 16 : i32
    %24 = tpu.dynamic_rotate %11 by %c16_i32 dim 1 : vector<4x256xf32>, i32 -> vector<4x256xf32>
    %c1_i32 = arith.constant 1 : i32
    %25 = vector.broadcast %c1_i32 : i32 to vector<1x256xi32>
    %26 = arith.cmpi sge, %2, %25 : vector<1x256xi32>
    %cst_6 = arith.constant 0.000000e+00 : f32
    %27 = vector.shape_cast %26 : vector<1x256xi1> to vector<1x256xi1>
    %28 = vector.broadcast %27 : vector<1x256xi1> to vector<4x256xi1>
    %29 = vector.broadcast %cst_6 : f32 to vector<4x256xf32>
    %30 = arith.select %28, %24, %29 : vector<4x256xi1>, vector<4x256xf32>
    %cst_7 = arith.constant 0.241970718 : f32
    %31 = vector.broadcast %cst_7 : f32 to vector<4x256xf32>
    %32 = arith.mulf %31, %30 : vector<4x256xf32>
    %33 = arith.addf %23, %32 : vector<4x256xf32>
    %c240_i32 = arith.constant 240 : i32
    %34 = tpu.dynamic_rotate %11 by %c240_i32 dim 1 : vector<4x256xf32>, i32 -> vector<4x256xf32>
    %c15_i32_8 = arith.constant 15 : i32
    %35 = vector.broadcast %c15_i32_8 : i32 to vector<1x256xi32>
    %36 = arith.cmpi slt, %2, %35 : vector<1x256xi32>
    %cst_9 = arith.constant 0.000000e+00 : f32
    %37 = vector.shape_cast %36 : vector<1x256xi1> to vector<1x256xi1>
    %38 = vector.broadcast %37 : vector<1x256xi1> to vector<4x256xi1>
    %39 = vector.broadcast %cst_9 : f32 to vector<4x256xf32>
    %40 = arith.select %38, %34, %39 : vector<4x256xi1>, vector<4x256xf32>
    %cst_10 = arith.constant 0.241970718 : f32
    %41 = vector.broadcast %cst_10 : f32 to vector<4x256xf32>
    %42 = arith.mulf %41, %40 : vector<4x256xf32>
    %43 = arith.addf %33, %42 : vector<4x256xf32>
    %c224_i32 = arith.constant 224 : i32
    %44 = tpu.dynamic_rotate %11 by %c224_i32 dim 1 : vector<4x256xf32>, i32 -> vector<4x256xf32>
    %c14_i32 = arith.constant 14 : i32
    %45 = vector.broadcast %c14_i32 : i32 to vector<1x256xi32>
    %46 = arith.cmpi slt, %2, %45 : vector<1x256xi32>
    %cst_11 = arith.constant 0.000000e+00 : f32
    %47 = vector.shape_cast %46 : vector<1x256xi1> to vector<1x256xi1>
    %48 = vector.broadcast %47 : vector<1x256xi1> to vector<4x256xi1>
    %49 = vector.broadcast %cst_11 : f32 to vector<4x256xf32>
    %50 = arith.select %48, %44, %49 : vector<4x256xi1>, vector<4x256xf32>
    %cst_12 = arith.constant 0.0539909676 : f32
    %51 = vector.broadcast %cst_12 : f32 to vector<4x256xf32>
    %52 = arith.mulf %51, %50 : vector<4x256xf32>
    %53 = arith.addf %43, %52 : vector<4x256xf32>
    %cst_13 = arith.constant 0.398942292 : f32
    %54 = vector.broadcast %cst_13 : f32 to vector<4x256xf32>
    %55 = arith.mulf %54, %53 : vector<4x256xf32>
    %c2_i32_14 = arith.constant 2 : i32
    %56 = tpu.dynamic_rotate %53 by %c2_i32_14 dim 1 : vector<4x256xf32>, i32 -> vector<4x256xf32>
    %c2_i32_15 = arith.constant 2 : i32
    %57 = vector.broadcast %c2_i32_15 : i32 to vector<1x256xi32>
    %58 = arith.cmpi sge, %4, %57 : vector<1x256xi32>
    %cst_16 = arith.constant 0.000000e+00 : f32
    %59 = vector.shape_cast %58 : vector<1x256xi1> to vector<1x256xi1>
    %60 = vector.broadcast %59 : vector<1x256xi1> to vector<4x256xi1>
    %61 = vector.broadcast %cst_16 : f32 to vector<4x256xf32>
    %62 = arith.select %60, %56, %61 : vector<4x256xi1>, vector<4x256xf32>
    %cst_17 = arith.constant 0.0539909676 : f32
    %63 = vector.broadcast %cst_17 : f32 to vector<4x256xf32>
    %64 = arith.mulf %63, %62 : vector<4x256xf32>
    %65 = arith.addf %55, %64 : vector<4x256xf32>
    %c1_i32_18 = arith.constant 1 : i32
    %66 = tpu.dynamic_rotate %53 by %c1_i32_18 dim 1 : vector<4x256xf32>, i32 -> vector<4x256xf32>
    %c1_i32_19 = arith.constant 1 : i32
    %67 = vector.broadcast %c1_i32_19 : i32 to vector<1x256xi32>
    %68 = arith.cmpi sge, %4, %67 : vector<1x256xi32>
    %cst_20 = arith.constant 0.000000e+00 : f32
    %69 = vector.shape_cast %68 : vector<1x256xi1> to vector<1x256xi1>
    %70 = vector.broadcast %69 : vector<1x256xi1> to vector<4x256xi1>
    %71 = vector.broadcast %cst_20 : f32 to vector<4x256xf32>
    %72 = arith.select %70, %66, %71 : vector<4x256xi1>, vector<4x256xf32>
    %cst_21 = arith.constant 0.241970718 : f32
    %73 = vector.broadcast %cst_21 : f32 to vector<4x256xf32>
    %74 = arith.mulf %73, %72 : vector<4x256xf32>
    %75 = arith.addf %65, %74 : vector<4x256xf32>
    %c255_i32 = arith.constant 255 : i32
    %76 = tpu.dynamic_rotate %53 by %c255_i32 dim 1 : vector<4x256xf32>, i32 -> vector<4x256xf32>
    %c15_i32_22 = arith.constant 15 : i32
    %77 = vector.broadcast %c15_i32_22 : i32 to vector<1x256xi32>
    %78 = arith.cmpi slt, %4, %77 : vector<1x256xi32>
    %cst_23 = arith.constant 0.000000e+00 : f32
    %79 = vector.shape_cast %78 : vector<1x256xi1> to vector<1x256xi1>
    %80 = vector.broadcast %79 : vector<1x256xi1> to vector<4x256xi1>
    %81 = vector.broadcast %cst_23 : f32 to vector<4x256xf32>
    %82 = arith.select %80, %76, %81 : vector<4x256xi1>, vector<4x256xf32>
    %cst_24 = arith.constant 0.241970718 : f32
    %83 = vector.broadcast %cst_24 : f32 to vector<4x256xf32>
    %84 = arith.mulf %83, %82 : vector<4x256xf32>
    %85 = arith.addf %75, %84 : vector<4x256xf32>
    %c254_i32 = arith.constant 254 : i32
    %86 = tpu.dynamic_rotate %53 by %c254_i32 dim 1 : vector<4x256xf32>, i32 -> vector<4x256xf32>
    %c14_i32_25 = arith.constant 14 : i32
    %87 = vector.broadcast %c14_i32_25 : i32 to vector<1x256xi32>
    %88 = arith.cmpi slt, %4, %87 : vector<1x256xi32>
    %cst_26 = arith.constant 0.000000e+00 : f32
    %89 = vector.shape_cast %88 : vector<1x256xi1> to vector<1x256xi1>
    %90 = vector.broadcast %89 : vector<1x256xi1> to vector<4x256xi1>
    %91 = vector.broadcast %cst_26 : f32 to vector<4x256xf32>
    %92 = arith.select %90, %86, %91 : vector<4x256xi1>, vector<4x256xf32>
    %cst_27 = arith.constant 0.0539909676 : f32
    %93 = vector.broadcast %cst_27 : f32 to vector<4x256xf32>
    %94 = arith.mulf %93, %92 : vector<4x256xf32>
    %95 = arith.addf %85, %94 : vector<4x256xf32>
    %cst_28 = arith.constant 6.000000e-01 : f32
    %96 = vector.broadcast %cst_28 : f32 to vector<4x256xf32>
    %97 = arith.cmpf ogt, %95, %96 : vector<4x256xf32>
    %98 = arith.extui %97 : vector<4x256xi1> to vector<4x256xi32>
    %99 = arith.sitofp %98 : vector<4x256xi32> to vector<4x256xf32>
    %100 = vector.shape_cast %99 : vector<4x256xf32> to vector<1x4x256xf32>
    %cst_29 = arith.constant dense<0.000000e+00> : vector<1xf32>
    %101 = vector.multi_reduction <add>, %100, %cst_29 [1, 2] : vector<1x4x256xf32> to vector<1xf32>
    %102 = vector.shape_cast %101 : vector<1xf32> to vector<1x1x1xf32>
    %103 = vector.extract %102[0, 0, 0] : f32 from vector<1x1x1xf32>
    %104 = vector.broadcast %103 : f32 to vector<1x1xf32>
    %c0_i32 = arith.constant 0 : i32
    %105 = arith.cmpi eq, %arg1, %c0_i32 : i32
    %106 = arith.extui %105 : i1 to i32
    %107 = arith.sitofp %106 : i32 to f32
    %108 = vector.broadcast %107 : f32 to vector<1x1xf32>
    %109 = arith.mulf %104, %108 : vector<1x1xf32>
    %c0_30 = arith.constant 0 : index
    %c0_31 = arith.constant 0 : index
    %110 = vector.load %arg5[%c0_30, %c0_31] : memref<1x1xf32, #tpu.memory_space<vmem>>, vector<1x1xf32>
    tpu.vector_store %arg5[%c0_30, %c0_31], %109 {strides = array<i32>} : memref<1x1xf32, #tpu.memory_space<vmem>>, vector<1x1xf32>,
    %c4_i32_32 = arith.constant 4 : i32
    %111 = arith.muli %arg0, %c4_i32_32 : i32
    %112 = tpu.iota {dimensions = array<i32: 0>} : vector<4x256xi32>
    %113 = vector.broadcast %111 : i32 to vector<4x256xi32>
    %114 = arith.addi %113, %112 : vector<4x256xi32>
    %c2_i32_33 = arith.constant 2 : i32
    %c0_i32_34 = arith.constant 0 : i32
    %115 = arith.cmpi eq, %c2_i32_33, %c0_i32_34 : i32
    %c1_i32_35 = arith.constant 1 : i32
    %116 = arith.select %115, %c1_i32_35, %c2_i32_33 : i32
    %117 = vector.broadcast %116 : i32 to vector<4x256xi32>
    %118 = arith.remsi %114, %117 : vector<4x256xi32>
    %c0_i32_36 = arith.constant 0 : i32
    %119 = vector.broadcast %c0_i32_36 : i32 to vector<4x256xi32>
    %120 = arith.cmpi ne, %118, %119 : vector<4x256xi32>
    %c0_i32_37 = arith.constant 0 : i32
    %121 = vector.broadcast %c0_i32_37 : i32 to vector<4x256xi32>
    %122 = arith.cmpi slt, %118, %121 : vector<4x256xi32>
    %c0_i32_38 = arith.constant 0 : i32
    %123 = arith.cmpi slt, %116, %c0_i32_38 : i32
    %124 = vector.broadcast %123 : i1 to vector<4x256xi1>
    %125 = vector.broadcast %124 : vector<4x256xi1> to vector<4x256xi1>
    %126 = arith.xori %122, %125 : vector<4x256xi1>
    %127 = arith.andi %126, %120 : vector<4x256xi1>
    %128 = vector.broadcast %116 : i32 to vector<4x256xi32>
    %129 = arith.addi %118, %128 : vector<4x256xi32>
    %130 = arith.select %127, %129, %118 : vector<4x256xi1>, vector<4x256xi32>
    %c0_i32_39 = arith.constant 0 : i32
    %131 = vector.broadcast %c0_i32_39 : i32 to vector<4x256xi32>
    %132 = arith.cmpi eq, %130, %131 : vector<4x256xi32>
    %cst_40 = arith.constant 1.000000e+00 : f32
    %133 = vector.broadcast %cst_40 : f32 to vector<4x256xf32>
    %134 = arith.select %132, %133, %99 : vector<4x256xi1>, vector<4x256xf32>
    %c0_41 = arith.constant 0 : index
    %c0_42 = arith.constant 0 : index
    %c0_43 = arith.constant 0 : index
    %135 = vector.load %arg3[%c0_41, %c0_42, %c0_43] : memref<4x8x256xf32, #tpu.memory_space<vmem>>, vector<4x8x256xf32>
    %136 = vector.shape_cast %134 : vector<4x256xf32> to vector<4x1x256xf32>
    %137 = vector.broadcast %136 : vector<4x1x256xf32> to vector<4x8x256xf32>
    %138 = arith.mulf %135, %137 : vector<4x8x256xf32>
    %c0_44 = arith.constant 0 : index
    %c0_45 = arith.constant 0 : index
    %c0_46 = arith.constant 0 : index
    %c0_47 = arith.constant 0 : index
    %139 = vector.load %arg4[%c0_44, %c0_45, %c0_46, %c0_47] : memref<4x2x8x256xf32, #tpu.memory_space<vmem>>, vector<4x1x8x256xf32>
    %140 = vector.shape_cast %139 : vector<4x1x8x256xf32> to vector<4x8x256xf32>
    %141 = vector.shape_cast %138 : vector<4x8x256xf32> to vector<4x1x8x256xf32>
    tpu.vector_store %arg4[%c0_44, %c0_45, %c0_46, %c0_47], %141 {strides = array<i32>} : memref<4x2x8x256xf32, #tpu.memory_space<vmem>>, vector<4x1x8x256xf32>,
    %c0_48 = arith.constant 0 : index
    %c1 = arith.constant 1 : index
    %c0_49 = arith.constant 0 : index
    %c0_50 = arith.constant 0 : index
    %142 = vector.load %arg4[%c0_48, %c1, %c0_49, %c0_50] : memref<4x2x8x256xf32, #tpu.memory_space<vmem>>, vector<4x1x8x256xf32>
    %143 = vector.shape_cast %142 : vector<4x1x8x256xf32> to vector<4x8x256xf32>
    %144 = vector.shape_cast %138 : vector<4x8x256xf32> to vector<4x1x8x256xf32>
    tpu.vector_store %arg4[%c0_48, %c1, %c0_49, %c0_50], %144 {strides = array<i32>} : memref<4x2x8x256xf32, #tpu.memory_space<vmem>>, vector<4x1x8x256xf32>,
    return
  }
  func.func @transform_0(%arg0: i32, %arg1: i32) -> (i32, i32, i32) {
    %c0_i32 = arith.constant 0 : i32
    %c0_i32_0 = arith.constant 0 : i32
    %c0_i32_1 = arith.constant 0 : i32
    return %arg0, %c0_i32, %c0_i32_0 : i32, i32, i32
  }
  func.func @transform_1(%arg0: i32, %arg1: i32) -> (i32, i32, i32) {
    %c0_i32 = arith.constant 0 : i32
    %c0_i32_0 = arith.constant 0 : i32
    return %arg0, %arg1, %c0_i32 : i32, i32, i32
  }
  func.func @transform_2(%arg0: i32, %arg1: i32) -> (i32, i32, i32, i32) {
    %c0_i32 = arith.constant 0 : i32
    %c0_i32_0 = arith.constant 0 : i32
    %c0_i32_1 = arith.constant 0 : i32
    return %arg0, %c0_i32, %arg1, %c0_i32_0 : i32, i32, i32, i32
  }
  func.func @transform_3(%arg0: i32, %arg1: i32) -> (i32, i32) {
    %c0_i32 = arith.constant 0 : i32
    return %arg0, %arg1 : i32, i32
  }
}

</mosaic_0001>

<llo_original>
// kernel: tpu_custom_call.1
$region0: #{tpu_custom_call.1}
  #allocation0 [shape = 'u32[]', space=smem, size = 0x4, offset = 0x4, fixed_abs, tag = 'smem constant byte address 0x4 - core index']
  #allocation1 [shape = 'u32[144,128]{1,0:T(1,128)}', space=vmem, size = 0x12000, scoped, tag = 'internal scratch']
  %s0 = inlined_call_operand.hbm [shape: f32[4,4,256], index: 0, kind: input, shape index: {}]
  %s1 = inlined_call_operand.hbm [shape: f32[4,8,256], index: 1, kind: input, shape index: {}]
  %s2 = inlined_call_operand.hbm [shape: f32[4,2,8,256], index: 2, kind: output, shape index: {0}]
  %s3 = inlined_call_operand.hbm [shape: f32[1,1], index: 3, kind: output, shape index: {1}]
  %4 = xla_tuple %s2, %s3
  %s5 = sld [smem:[#allocation0]]
  $region34: #{tpu_custom_call.1} parent=0
    _
  %s7 = ssub.s32 1, %s5
  %s8 = scalar_select 0, %s7, %s5
  $region1: #{tpu_custom_call.1} parent=0
    #allocation2 [shape = 'u8[16384]{0}', space=vmem, size = 0x4000, scoped, tag = 'input window, operand 0, single buffered']
    #allocation3 [shape = 's32[1]{0}', space=sflag, size = 0x4, scoped, tag = 'scoped memory for tpu_custom_call.1']
    #allocation4 [shape = 's32[1]{0}', space=sflag, size = 0x4, scoped, tag = 'scoped memory for tpu_custom_call.1']
    #allocation5 [shape = 'u8[32768]{0}', space=vmem, size = 0x8000, scoped, tag = 'input window, operand 1, single buffered']
    #allocation6 [shape = 's32[1]{0}', space=sflag, size = 0x4, scoped, tag = 'scoped memory for tpu_custom_call.1']
    #allocation7 [shape = 'u8[65536]{0}', space=vmem, size = 0x10000, scoped, tag = 'output window, operand 0, single buffered']
    #allocation8 [shape = 'u8[512]{0}', space=vmem, size = 0x400, scoped, tag = 'output window, operand 1, single buffered']
    #allocation9 [shape = 's32[1]{0}', space=sflag, size = 0x4, scoped, tag = 'scoped memory for tpu_custom_call.1']
    %9 = vsyncpa [#allocation3], 0
    %10 = vsyncpa [#allocation6], 0
    %11 = vsyncpa [#allocation4], 0
    %12 = vsyncpa [#allocation9], 0
    // Predicated region
    $region2: #{tpu_custom_call.1} parent=1 // pred_check
      _
    $region3: #{tpu_custom_call.1} parent=1 // pred_check_branch
      %14 = sbr.rel (0) target = $region5
    $region4: #{tpu_custom_call.1} parent=1 // pred_region
      %s16 = ssub.s32 512, 512
      %17 = vsyncadd [#allocation3], %s16
      %s18 = sshll.u32 [#allocation2], 4
      %s19 = int_to_ptr.vmem [resolvable:$true] %s18
      %24 = dma.hbm_to_vmem [thread:$0]  %s0, 512, %s19, [#allocation3], 128, 128, 8
    $region5: #{tpu_custom_call.1} parent=1 // pred_fallthru
      _
    // Predicated region
    $region6: #{tpu_custom_call.1} parent=1 // pred_check
      _
    $region7: #{tpu_custom_call.1} parent=1 // pred_check_branch
      %26 = sbr.rel (0) target = $region9
    $region8: #{tpu_custom_call.1} parent=1 // pred_region
      %s28 = ssub.s32 1024, 1024
      %29 = vsyncadd [#allocation6], %s28
      %s30 = sshll.u32 [#allocation5], 4
      %s31 = int_to_ptr.vmem [resolvable:$true] %s30
      %36 = dma.hbm_to_vmem [thread:$0]  %s1, 1024, %s31, [#allocation6], 256, 256, 16
    $region9: #{tpu_custom_call.1} parent=1 // pred_fallthru
      _
    // Predicated region
    $region10: #{tpu_custom_call.1} parent=1 // pred_check
      _
    $region11: #{tpu_custom_call.1} parent=1 // pred_check_branch
      %38 = sbr.rel (0) target = $region13
    $region12: #{tpu_custom_call.1} parent=1 // pred_region
      %39 = dma.done [#allocation3], 512
    $region13: #{tpu_custom_call.1} parent=1 // pred_fallthru
      _
    // Predicated region
    $region14: #{tpu_custom_call.1} parent=1 // pred_check
      _
    $region15: #{tpu_custom_call.1} parent=1 // pred_check_branch
      %41 = sbr.rel (0) target = $region17
    $region16: #{tpu_custom_call.1} parent=1 // pred_region
      %42 = dma.done [#allocation6], 1024
    $region17: #{tpu_custom_call.1} parent=1 // pred_fallthru
      _
    %v43 = vlaneseq
    %v44 = vand.u32 %v43, 127
    %v45 = vadd.s32 %v44, 128
    %v46 = vshra.s32 %v44, 4
    %v47 = vshra.s32 %v45, 4
    %v48 = vand.u32 %v44, 15
    %v49 = vand.u32 %v45, 15
    %v50 = vld [vmem:[#allocation2] sm:$0xff]
    %v51 = vld [vmem:[#allocation2 + $0x8] sm:$0xff]
    %v52 = vld [vmem:[#allocation2 + $0x10] sm:$0xff]
    %v53 = vld [vmem:[#allocation2 + $0x18] sm:$0xff]
    %v58 = vcombine.high %v50, %v50
    %v59 = vcombine.high %v51, %v51
    %v60 = vcombine.high %v52, %v52
    %v61 = vcombine.high %v53, %v53
    %vm66 = vcmask 1043456
    %v67 = vsel %vm66, %v50, -inf
    %v68 = vrot.slane %v67, 4
    %v69 = vmax.f32 %v67, %v68
    %v70 = vrot.slane %v69, 2
    %v71 = vmax.f32 %v69, %v70
    %v72 = vrot.slane %v71, 1
    %v73 = vmax.f32 %v71, %v72
    %v74 = vsel %vm66, %v58, -inf
    %v75 = vrot.slane %v74, 4
    %v76 = vmax.f32 %v74, %v75
    %v77 = vrot.slane %v76, 2
    %v78 = vmax.f32 %v76, %v77
    %v79 = vrot.slane %v78, 1
    %v80 = vmax.f32 %v78, %v79
    %v81 = vsel %vm66, %v51, -inf
    %v82 = vrot.slane %v81, 4
    %v83 = vmax.f32 %v81, %v82
    %v84 = vrot.slane %v83, 2
    %v85 = vmax.f32 %v83, %v84
    %v86 = vrot.slane %v85, 1
    %v87 = vmax.f32 %v85, %v86
    %v88 = vsel %vm66, %v59, -inf
    %v89 = vrot.slane %v88, 4
    %v90 = vmax.f32 %v88, %v89
    %v91 = vrot.slane %v90, 2
    %v92 = vmax.f32 %v90, %v91
    %v93 = vrot.slane %v92, 1
    %v94 = vmax.f32 %v92, %v93
    %v95 = vsel %vm66, %v52, -inf
    %v96 = vrot.slane %v95, 4
    %v97 = vmax.f32 %v95, %v96
    %v98 = vrot.slane %v97, 2
    %v99 = vmax.f32 %v97, %v98
    %v100 = vrot.slane %v99, 1
    %v101 = vmax.f32 %v99, %v100
    %v102 = vsel %vm66, %v60, -inf
    %v103 = vrot.slane %v102, 4
    %v104 = vmax.f32 %v102, %v103
    %v105 = vrot.slane %v104, 2
    %v106 = vmax.f32 %v104, %v105
    %v107 = vrot.slane %v106, 1
    %v108 = vmax.f32 %v106, %v107
    %v109 = vsel %vm66, %v53, -inf
    %v110 = vrot.slane %v109, 4
    %v111 = vmax.f32 %v109, %v110
    %v112 = vrot.slane %v111, 2
    %v113 = vmax.f32 %v111, %v112
    %v114 = vrot.slane %v113, 1
    %v115 = vmax.f32 %v113, %v114
    %v116 = vsel %vm66, %v61, -inf
    %v117 = vrot.slane %v116, 4
    %v118 = vmax.f32 %v116, %v117
    %v119 = vrot.slane %v118, 2
    %v120 = vmax.f32 %v118, %v119
    %v121 = vrot.slane %v120, 1
    %v122 = vmax.f32 %v120, %v121
    %v123 = vxor.u32 %v73, 2147483648
    %v124 = vxor.u32 %v80, 2147483648
    %v125 = vxor.u32 %v87, 2147483648
    %v126 = vxor.u32 %v94, 2147483648
    %v127 = vxor.u32 %v101, 2147483648
    %v128 = vxor.u32 %v108, 2147483648
    %v129 = vxor.u32 %v115, 2147483648
    %v130 = vxor.u32 %v122, 2147483648
    %v131 = vmul.f32 %v123, 1.442695
    %v132 = vpow.pop %v131
    %v133 = vmul.f32 %v124, 1.442695
    %v134 = vpow.pop %v133
    %v135 = vmul.f32 %v125, 1.442695
    %v136 = vpow.pop %v135
    %v137 = vmul.f32 %v126, 1.442695
    %v138 = vpow.pop %v137
    %v139 = vmul.f32 %v127, 1.442695
    %v140 = vpow.pop %v139
    %v141 = vmul.f32 %v128, 1.442695
    %v142 = vpow.pop %v141
    %v143 = vmul.f32 %v129, 1.442695
    %v144 = vpow.pop %v143
    %v145 = vmul.f32 %v130, 1.442695
    %v146 = vpow.pop %v145
    %v147 = vadd.f32 %v132, 1.0
    %v148 = vadd.f32 %v134, 1.0
    %v149 = vadd.f32 %v136, 1.0
    %v150 = vadd.f32 %v138, 1.0
    %v151 = vadd.f32 %v140, 1.0
    %v152 = vadd.f32 %v142, 1.0
    %v153 = vadd.f32 %v144, 1.0
    %v154 = vadd.f32 %v146, 1.0
    %v155 = vrcp.pop %v147
    %v156 = vmul.f32 1.0, %v155
    %v157 = vrcp.pop %v148
    %v158 = vmul.f32 1.0, %v157
    %v159 = vrcp.pop %v149
    %v160 = vmul.f32 1.0, %v159
    %v161 = vrcp.pop %v150
    %v162 = vmul.f32 1.0, %v161
    %v163 = vrcp.pop %v151
    %v164 = vmul.f32 1.0, %v163
    %v165 = vrcp.pop %v152
    %v166 = vmul.f32 1.0, %v165
    %v167 = vrcp.pop %v153
    %v168 = vmul.f32 1.0, %v167
    %v169 = vrcp.pop %v154
    %v170 = vmul.f32 1.0, %v169
    %v171 = vmul.f32 %v156, 0.3989423
    %v172 = vmul.f32 %v158, 0.3989423
    %v173 = vmul.f32 %v160, 0.3989423
    %v174 = vmul.f32 %v162, 0.3989423
    %v175 = vmul.f32 %v164, 0.3989423
    %v176 = vmul.f32 %v166, 0.3989423
    %v177 = vmul.f32 %v168, 0.3989423
    %v178 = vmul.f32 %v170, 0.3989423
    %vm187 = vcmask 1041409
    %v188 = vsel %vm187, %v160, %v156
    %vm189 = vcmask 1042434
    %v190 = vsel %vm189, %v164, %v188
    %vm191 = vcmask 1043459
    %v192 = vsel %vm191, %v168, %v190
    %v193 = vsel %vm187, %v162, %v158
    %v194 = vsel %vm189, %v166, %v193
    %v195 = vsel %vm191, %v170, %v194
    %198 = vrot.lane.b32.xlu0 %v192, 32
    %v199 = vpop.permute.xlu0 %198
    %200 = vrot.lane.b32.xlu0 %v195, 32
    %v201 = vpop.permute.xlu0 %200
    %vm202 = vcmp.lt.s32.totalorder %v44, 32
    %v203 = vsel %vm202, %v199, %v201
    %v204 = vsel %vm202, %v201, %v199
    %vm205 = vcmp.ge.s32.totalorder %v46, 2
    %vm206 = vcmp.ge.s32.totalorder %v47, 2
    %v207 = vsel %vm205, 1, 0
    %v208 = vsel %vm206, 1, 0
    %vm209 = vcmp.eq.s32.totalorder %v207, 1
    %vm210 = vcmp.eq.s32.totalorder %v208, 1
    %v211 = vsel %vm209, %v204, 0.0
    %v212 = vsel %vm210, %v203, 0.0
    %v213 = vmul.f32 %v211, 0.053990968
    %v214 = vmul.f32 %v212, 0.053990968
    %v217 = vrot.slane %v213, 1
    %v218 = vrot.slane %v214, 1
    %v219 = vrot.slane %v213, 2
    %v220 = vrot.slane %v214, 2
    %v221 = vrot.slane %v213, 3
    %v222 = vrot.slane %v214, 3
    %v231 = vadd.f32 %v171, %v213
    %v232 = vadd.f32 %v172, %v214
    %v233 = vadd.f32 %v173, %v217
    %v234 = vadd.f32 %v174, %v218
    %v235 = vadd.f32 %v175, %v219
    %v236 = vadd.f32 %v176, %v220
    %v237 = vadd.f32 %v177, %v221
    %v238 = vadd.f32 %v178, %v222
    %239 = vrot.lane.b32.xlu0 %v192, 16
    %v240 = vpop.permute.xlu0 %239
    %241 = vrot.lane.b32.xlu0 %v195, 16
    %v242 = vpop.permute.xlu0 %241
    %vm243 = vcmp.lt.s32.totalorder %v44, 16
    %v244 = vsel %vm243, %v240, %v242
    %v245 = vsel %vm243, %v242, %v240
    %vm246 = vcmp.ge.s32.totalorder %v46, 1
    %vm247 = vcmp.ge.s32.totalorder %v47, 1
    %v248 = vsel %vm246, 1, 0
    %v249 = vsel %vm247, 1, 0
    %vm250 = vcmp.eq.s32.totalorder %v248, 1
    %vm251 = vcmp.eq.s32.totalorder %v249, 1
    %v252 = vsel %vm250, %v245, 0.0
    %v253 = vsel %vm251, %v244, 0.0
    %v254 = vmul.f32 %v252, 0.24197072
    %v255 = vmul.f32 %v253, 0.24197072
    %v258 = vrot.slane %v254, 1
    %v259 = vrot.slane %v255, 1
    %v260 = vrot.slane %v254, 2
    %v261 = vrot.slane %v255, 2
    %v262 = vrot.slane %v254, 3
    %v263 = vrot.slane %v255, 3
    %v272 = vadd.f32 %v231, %v254
    %v273 = vadd.f32 %v232, %v255
    %v274 = vadd.f32 %v233, %v258
    %v275 = vadd.f32 %v234, %v259
    %v276 = vadd.f32 %v235, %v260
    %v277 = vadd.f32 %v236, %v261
    %v278 = vadd.f32 %v237, %v262
    %v279 = vadd.f32 %v238, %v263
    %280 = vrot.lane.b32.xlu0 %v192, 112
    %v281 = vpop.permute.xlu0 %280
    %282 = vrot.lane.b32.xlu0 %v195, 112
    %v283 = vpop.permute.xlu0 %282
    %vm284 = vcmp.lt.s32.totalorder %v44, 112
    %v285 = vsel %vm284, %v281, %v283
    %v286 = vsel %vm284, %v283, %v281
    %vm287 = vcmp.lt.s32.totalorder %v46, 15
    %vm288 = vcmp.lt.s32.totalorder %v47, 15
    %v289 = vsel %vm287, 1, 0
    %v290 = vsel %vm288, 1, 0
    %vm291 = vcmp.eq.s32.totalorder %v289, 1
    %vm292 = vcmp.eq.s32.totalorder %v290, 1
    %v293 = vsel %vm291, %v285, 0.0
    %v294 = vsel %vm292, %v286, 0.0
    %v295 = vmul.f32 %v293, 0.24197072
    %v296 = vmul.f32 %v294, 0.24197072
    %v299 = vrot.slane %v295, 1
    %v300 = vrot.slane %v296, 1
    %v301 = vrot.slane %v295, 2
    %v302 = vrot.slane %v296, 2
    %v303 = vrot.slane %v295, 3
    %v304 = vrot.slane %v296, 3
    %v313 = vadd.f32 %v272, %v295
    %v314 = vadd.f32 %v273, %v296
    %v315 = vadd.f32 %v274, %v299
    %v316 = vadd.f32 %v275, %v300
    %v317 = vadd.f32 %v276, %v301
    %v318 = vadd.f32 %v277, %v302
    %v319 = vadd.f32 %v278, %v303
    %v320 = vadd.f32 %v279, %v304
    %321 = vrot.lane.b32.xlu0 %v192, 96
    %v322 = vpop.permute.xlu0 %321
    %323 = vrot.lane.b32.xlu0 %v195, 96
    %v324 = vpop.permute.xlu0 %323
    %vm325 = vcmp.lt.s32.totalorder %v44, 96
    %v326 = vsel %vm325, %v322, %v324
    %v327 = vsel %vm325, %v324, %v322
    %vm328 = vcmp.lt.s32.totalorder %v46, 14
    %vm329 = vcmp.lt.s32.totalorder %v47, 14
    %v330 = vsel %vm328, 1, 0
    %v331 = vsel %vm329, 1, 0
    %vm332 = vcmp.eq.s32.totalorder %v330, 1
    %vm333 = vcmp.eq.s32.totalorder %v331, 1
    %v334 = vsel %vm332, %v326, 0.0
    %v335 = vsel %vm333, %v327, 0.0
    %v336 = vmul.f32 %v334, 0.053990968
    %v337 = vmul.f32 %v335, 0.053990968
    %v340 = vrot.slane %v336, 1
    %v341 = vrot.slane %v337, 1
    %v342 = vrot.slane %v336, 2
    %v343 = vrot.slane %v337, 2
    %v344 = vrot.slane %v336, 3
    %v345 = vrot.slane %v337, 3
    %v354 = vadd.f32 %v313, %v336
    %v355 = vadd.f32 %v314, %v337
    %v356 = vadd.f32 %v315, %v340
    %v357 = vadd.f32 %v316, %v341
    %v358 = vadd.f32 %v317, %v342
    %v359 = vadd.f32 %v318, %v343
    %v360 = vadd.f32 %v319, %v344
    %v361 = vadd.f32 %v320, %v345
    %v362 = vmul.f32 %v354, 0.3989423
    %v363 = vmul.f32 %v355, 0.3989423
    %v364 = vmul.f32 %v356, 0.3989423
    %v365 = vmul.f32 %v357, 0.3989423
    %v366 = vmul.f32 %v358, 0.3989423
    %v367 = vmul.f32 %v359, 0.3989423
    %v368 = vmul.f32 %v360, 0.3989423
    %v369 = vmul.f32 %v361, 0.3989423
    %v378 = vrot.slane %v356, 7
    %v379 = vsel %vm187, %v378, %v354
    %v380 = vrot.slane %v358, 6
    %v381 = vsel %vm189, %v380, %v379
    %v382 = vrot.slane %v360, 5
    %v383 = vsel %vm191, %v382, %v381
    %v384 = vrot.slane %v357, 7
    %v385 = vsel %vm187, %v384, %v355
    %v386 = vrot.slane %v359, 6
    %v387 = vsel %vm189, %v386, %v385
    %v388 = vrot.slane %v361, 5
    %v389 = vsel %vm191, %v388, %v387
    %392 = vrot.lane.b32.xlu0 %v383, 2
    %v393 = vpop.permute.xlu0 %392
    %394 = vrot.lane.b32.xlu0 %v389, 2
    %v395 = vpop.permute.xlu0 %394
    %vm396 = vcmp.lt.s32.totalorder %v44, 2
    %v397 = vsel %vm396, %v393, %v395
    %v398 = vsel %vm396, %v395, %v393
    %vm399 = vcmp.ge.s32.totalorder %v48, 2
    %vm400 = vcmp.ge.s32.totalorder %v49, 2
    %v401 = vsel %vm399, 1, 0
    %v402 = vsel %vm400, 1, 0
    %vm403 = vcmp.eq.s32.totalorder %v401, 1
    %vm404 = vcmp.eq.s32.totalorder %v402, 1
    %v405 = vsel %vm403, %v398, 0.0
    %v406 = vsel %vm404, %v397, 0.0
    %v407 = vmul.f32 %v405, 0.053990968
    %v408 = vmul.f32 %v406, 0.053990968
    %v411 = vrot.slane %v407, 1
    %v412 = vrot.slane %v408, 1
    %v413 = vrot.slane %v407, 2
    %v414 = vrot.slane %v408, 2
    %v415 = vrot.slane %v407, 3
    %v416 = vrot.slane %v408, 3
    %v425 = vadd.f32 %v362, %v407
    %v426 = vadd.f32 %v363, %v408
    %v427 = vadd.f32 %v364, %v411
    %v428 = vadd.f32 %v365, %v412
    %v429 = vadd.f32 %v366, %v413
    %v430 = vadd.f32 %v367, %v414
    %v431 = vadd.f32 %v368, %v415
    %v432 = vadd.f32 %v369, %v416
    %433 = vrot.lane.b32.xlu0 %v383, 1
    %v434 = vpop.permute.xlu0 %433
    %435 = vrot.lane.b32.xlu0 %v389, 1
    %v436 = vpop.permute.xlu0 %435
    %vm437 = vcmp.lt.s32.totalorder %v44, 1
    %v438 = vsel %vm437, %v434, %v436
    %v439 = vsel %vm437, %v436, %v434
    %vm440 = vcmp.ge.s32.totalorder %v48, 1
    %vm441 = vcmp.ge.s32.totalorder %v49, 1
    %v442 = vsel %vm440, 1, 0
    %v443 = vsel %vm441, 1, 0
    %vm444 = vcmp.eq.s32.totalorder %v442, 1
    %vm445 = vcmp.eq.s32.totalorder %v443, 1
    %v446 = vsel %vm444, %v439, 0.0
    %v447 = vsel %vm445, %v438, 0.0
    %v448 = vmul.f32 %v446, 0.24197072
    %v449 = vmul.f32 %v447, 0.24197072
    %v452 = vrot.slane %v448, 1
    %v453 = vrot.slane %v449, 1
    %v454 = vrot.slane %v448, 2
    %v455 = vrot.slane %v449, 2
    %v456 = vrot.slane %v448, 3
    %v457 = vrot.slane %v449, 3
    %v466 = vadd.f32 %v425, %v448
    %v467 = vadd.f32 %v426, %v449
    %v468 = vadd.f32 %v427, %v452
    %v469 = vadd.f32 %v428, %v453
    %v470 = vadd.f32 %v429, %v454
    %v471 = vadd.f32 %v430, %v455
    %v472 = vadd.f32 %v431, %v456
    %v473 = vadd.f32 %v432, %v457
    %474 = vrot.lane.b32.xlu0 %v383, 127
    %v475 = vpop.permute.xlu0 %474
    %476 = vrot.lane.b32.xlu0 %v389, 127
    %v477 = vpop.permute.xlu0 %476
    %vm478 = vcmp.lt.s32.totalorder %v44, 127
    %v479 = vsel %vm478, %v475, %v477
    %v480 = vsel %vm478, %v477, %v475
    %vm481 = vcmp.lt.s32.totalorder %v48, 15
    %vm482 = vcmp.lt.s32.totalorder %v49, 15
    %v483 = vsel %vm481, 1, 0
    %v484 = vsel %vm482, 1, 0
    %vm485 = vcmp.eq.s32.totalorder %v483, 1
    %vm486 = vcmp.eq.s32.totalorder %v484, 1
    %v487 = vsel %vm485, %v479, 0.0
    %v488 = vsel %vm486, %v480, 0.0
    %v489 = vmul.f32 %v487, 0.24197072
    %v490 = vmul.f32 %v488, 0.24197072
    %v493 = vrot.slane %v489, 1
    %v494 = vrot.slane %v490, 1
    %v495 = vrot.slane %v489, 2
    %v496 = vrot.slane %v490, 2
    %v497 = vrot.slane %v489, 3
    %v498 = vrot.slane %v490, 3
    %v507 = vadd.f32 %v466, %v489
    %v508 = vadd.f32 %v467, %v490
    %v509 = vadd.f32 %v468, %v493
    %v510 = vadd.f32 %v469, %v494
    %v511 = vadd.f32 %v470, %v495
    %v512 = vadd.f32 %v471, %v496
    %v513 = vadd.f32 %v472, %v497
    %v514 = vadd.f32 %v473, %v498
    %515 = vrot.lane.b32.xlu0 %v383, 126
    %v516 = vpop.permute.xlu0 %515
    %517 = vrot.lane.b32.xlu0 %v389, 126
    %v518 = vpop.permute.xlu0 %517
    %vm519 = vcmp.lt.s32.totalorder %v44, 126
    %v520 = vsel %vm519, %v516, %v518
    %v521 = vsel %vm519, %v518, %v516
    %vm522 = vcmp.lt.s32.totalorder %v48, 14
    %vm523 = vcmp.lt.s32.totalorder %v49, 14
    %v524 = vsel %vm522, 1, 0
    %v525 = vsel %vm523, 1, 0
    %vm526 = vcmp.eq.s32.totalorder %v524, 1
    %vm527 = vcmp.eq.s32.totalorder %v525, 1
    %v528 = vsel %vm526, %v520, 0.0
    %v529 = vsel %vm527, %v521, 0.0
    %v530 = vmul.f32 %v528, 0.053990968
    %v531 = vmul.f32 %v529, 0.053990968
    %v534 = vrot.slane %v530, 1
    %v535 = vrot.slane %v531, 1
    %v536 = vrot.slane %v530, 2
    %v537 = vrot.slane %v531, 2
    %v538 = vrot.slane %v530, 3
    %v539 = vrot.slane %v531, 3
    %v548 = vadd.f32 %v507, %v530
    %v549 = vadd.f32 %v508, %v531
    %v550 = vadd.f32 %v509, %v534
    %v551 = vadd.f32 %v510, %v535
    %v552 = vadd.f32 %v511, %v536
    %v553 = vadd.f32 %v512, %v537
    %v554 = vadd.f32 %v513, %v538
    %v555 = vadd.f32 %v514, %v539
    %vm556 = vcmp.gt.f32.partialorder %v548, 0.6
    %vm557 = vcmp.gt.f32.partialorder %v549, 0.6
    %vm558 = vcmp.gt.f32.partialorder %v550, 0.6
    %vm559 = vcmp.gt.f32.partialorder %v551, 0.6
    %vm560 = vcmp.gt.f32.partialorder %v552, 0.6
    %vm561 = vcmp.gt.f32.partialorder %v553, 0.6
    %vm562 = vcmp.gt.f32.partialorder %v554, 0.6
    %vm563 = vcmp.gt.f32.partialorder %v555, 0.6
    %v564 = vsel %vm556, 1, 0
    %v565 = vsel %vm557, 1, 0
    %v566 = vsel %vm558, 1, 0
    %v567 = vsel %vm559, 1, 0
    %v568 = vsel %vm560, 1, 0
    %v569 = vsel %vm561, 1, 0
    %v570 = vsel %vm562, 1, 0
    %v571 = vsel %vm563, 1, 0
    %v572 = vcvt.s32.f32 %v564
    %v573 = vcvt.s32.f32 %v565
    %v574 = vcvt.s32.f32 %v566
    %v575 = vcvt.s32.f32 %v567
    %v576 = vcvt.s32.f32 %v568
    %v577 = vcvt.s32.f32 %v569
    %v578 = vcvt.s32.f32 %v570
    %v579 = vcvt.s32.f32 %v571
    %v588 = vrot.slane %v574, 7
    %v589 = vsel %vm187, %v588, %v572
    %v590 = vrot.slane %v576, 6
    %v591 = vsel %vm189, %v590, %v589
    %v592 = vrot.slane %v578, 5
    %v593 = vsel %vm191, %v592, %v591
    %v594 = vrot.slane %v575, 7
    %v595 = vsel %vm187, %v594, %v573
    %v596 = vrot.slane %v577, 6
    %v597 = vsel %vm189, %v596, %v595
    %v598 = vrot.slane %v579, 5
    %v599 = vsel %vm191, %v598, %v597
    %v602 = vsel %vm66, %v593, 0.0
    %v603 = vsel %vm66, %v599, 0.0
    %v604 = vadd.f32 %v602, %v603
    %605 = vadd.xlane.f32.xlu0 %v604
    %v606 = vpop.xlane.xlu0 %605
    %v607 = vrot.slane %v606, 4
    %v608 = vadd.f32 %v606, %v607
    %v609 = vrot.slane %v608, 2
    %v610 = vadd.f32 %v608, %v609
    %v611 = vrot.slane %v610, 1
    %v612 = vadd.f32 %v610, %v611
    %s613 = vtos %v612
    %v614 = vstv %s613
    %p615 = scmp.eq.s32.totalorder 0, 0
    %s616 = scalar_select %p615, 1, 0
    %s617 = scvt.s32.f32 %s616
    %v618 = vstv %s617
    %v619 = vmul.f32 %v614, %v618
    %vm620 = vcmask 0
    %621 = vst.msk [vmem:[#allocation8] sm:$0x1] %vm620, %v619
    %s622 = smul.u32 0, 4
    %v623 = vlaneseq
    %v624 = vshrl.u32 %v623, 7
    %v625 = vstv %s622
    %v626 = vadd.s32 %v625, %v624
    %vm627 = vcmp.lt.s32.totalorder %v626, 0
    %v628 = vsub.s32 0, %v626
    %v629 = vsel %vm627, %v628, %v626
    %v630 = vshrl.u32 %v629, 1
    %v631 = vand.u32 %v629, 1
    %v632 = vsub.s32 0, %v631
    %v633 = vsel %vm627, %v632, %v631
    %vm634 = vcmp.ne.s32.totalorder %v633, 0
    %vm635 = vcmp.lt.s32.totalorder %v633, 0
    %vm636 = vmand %vm635, %vm634
    %v637 = vadd.s32 %v633, 2
    %v638 = vsel %vm636, %v637, %v633
    %vm639 = vcmp.eq.s32.totalorder %v638, 0
    %v640 = vsel %vm639, 1.0, %v593
    %v641 = vsel %vm639, 1.0, %v599
    %v642 = vld [vmem:[#allocation5] sm:$0xff]
    %v643 = vld [vmem:[#allocation5 + $0x8] sm:$0xff]
    %v644 = vld [vmem:[#allocation5 + $0x10] sm:$0xff]
    %v645 = vld [vmem:[#allocation5 + $0x18] sm:$0xff]
    %v646 = vld [vmem:[#allocation5 + $0x20] sm:$0xff]
    %v647 = vld [vmem:[#allocation5 + $0x28] sm:$0xff]
    %v648 = vld [vmem:[#allocation5 + $0x30] sm:$0xff]
    %v649 = vld [vmem:[#allocation5 + $0x38] sm:$0xff]
    %v652 = vcombine.low %v640, %v641
    %v654 = vunpack.c.l.s4 1966171168
    %v655 = vunpack.c.0.s8 %v654
    %v656 = vlaneseq
    %v657 = vshrl.u32 %v656, 7
    %v658 = vsub.s32 %v655, %v657
    %v659 = vrot.slane %v652, %v658
    %v660 = vcombine.high %v659, %v659
    %v662 = vunpack.c.l.s4 1966171168
    %v663 = vunpack.c.0.s8 %v662
    %v664 = vlaneseq
    %v665 = vshrl.u32 %v664, 7
    %v666 = vsub.s32 %v663, %v665
    %v667 = vrot.slane %v659, %v666
    %v669 = vunpack.c.l.s4 1966171168
    %v670 = vunpack.c.0.s8 %v669
    %v671 = vlaneseq
    %v672 = vshrl.u32 %v671, 7
    %v673 = vsub.s32 %v670, %v672
    %v674 = vrot.slane %v660, %v673
    %v675 = vcombine.high %v667, %v667
    %v676 = vcombine.high %v674, %v674
    %v677 = vlaneseq
    %v678 = vshrl.u32 %v677, 7
    %v679 = vsub.s32 0, %v678
    %v680 = vrot.slane %v667, %v679
    %v681 = vlaneseq
    %v682 = vshrl.u32 %v681, 7
    %v683 = vsub.s32 1, %v682
    %v684 = vrot.slane %v667, %v683
    %v685 = vlaneseq
    %v686 = vshrl.u32 %v685, 7
    %v687 = vsub.s32 0, %v686
    %v688 = vrot.slane %v674, %v687
    %v689 = vlaneseq
    %v690 = vshrl.u32 %v689, 7
    %v691 = vsub.s32 1, %v690
    %v692 = vrot.slane %v674, %v691
    %v693 = vlaneseq
    %v694 = vshrl.u32 %v693, 7
    %v695 = vsub.s32 0, %v694
    %v696 = vrot.slane %v675, %v695
    %v697 = vlaneseq
    %v698 = vshrl.u32 %v697, 7
    %v699 = vsub.s32 1, %v698
    %v700 = vrot.slane %v675, %v699
    %v701 = vlaneseq
    %v702 = vshrl.u32 %v701, 7
    %v703 = vsub.s32 0, %v702
    %v704 = vrot.slane %v676, %v703
    %v705 = vlaneseq
    %v706 = vshrl.u32 %v705, 7
    %v707 = vsub.s32 1, %v706
    %v708 = vrot.slane %v676, %v707
    %v717 = vmul.f32 %v642, %v680
    %v718 = vmul.f32 %v643, %v684
    %v719 = vmul.f32 %v644, %v688
    %v720 = vmul.f32 %v645, %v692
    %v721 = vmul.f32 %v646, %v696
    %v722 = vmul.f32 %v647, %v700
    %v723 = vmul.f32 %v648, %v704
    %v724 = vmul.f32 %v649, %v708
    %725 = vst [vmem:[#allocation7] sm:$0xff] %v717
    %726 = vst [vmem:[#allocation7 + $0x8] sm:$0xff] %v718
    %727 = vst [vmem:[#allocation7 + $0x20] sm:$0xff] %v719
    %728 = vst [vmem:[#allocation7 + $0x28] sm:$0xff] %v720
    %729 = vst [vmem:[#allocation7 + $0x40] sm:$0xff] %v721
    %730 = vst [vmem:[#allocation7 + $0x48] sm:$0xff] %v722
    %731 = vst [vmem:[#allocation7 + $0x60] sm:$0xff] %v723
    %732 = vst [vmem:[#allocation7 + $0x68] sm:$0xff] %v724
    %s733 = scalar_lea.vmem [#allocation7], 16
    %734 = vst [vmem:[%s733] sm:$0xff] %v717
    %735 = vst [vmem:[%s733 + $0x8] sm:$0xff] %v718
    %736 = vst [vmem:[%s733 + $0x20] sm:$0xff] %v719
    %737 = vst [vmem:[%s733 + $0x28] sm:$0xff] %v720
    %738 = vst [vmem:[%s733 + $0x40] sm:$0xff] %v721
    %739 = vst [vmem:[%s733 + $0x48] sm:$0xff] %v722
    %740 = vst [vmem:[%s733 + $0x60] sm:$0xff] %v723
    %741 = vst [vmem:[%s733 + $0x68] sm:$0xff] %v724
    // Predicated region
    $region18: #{tpu_custom_call.1} parent=1 // pred_check
      _
    $region19: #{tpu_custom_call.1} parent=1 // pred_check_branch
      %743 = sbr.rel (0) target = $region21
    $region20: #{tpu_custom_call.1} parent=1 // pred_region
      %s745 = ssub.s32 2048, 2048
      %746 = vsyncadd [#allocation4], %s745
      %s747 = sshll.u32 [#allocation7], 4
      %s748 = int_to_ptr.vmem [resolvable:$true] %s747
      %753 = dma.vmem_to_hbm [thread:$0]  %s748, 2048, %s2, [#allocation4], 256, 256, 16
    $region21: #{tpu_custom_call.1} parent=1 // pred_fallthru
      _
    // Predicated region
    $region22: #{tpu_custom_call.1} parent=1 // pred_check
      _
    $region23: #{tpu_custom_call.1} parent=1 // pred_check_branch
      %755 = sbr.rel (0) target = $region25
    $region24: #{tpu_custom_call.1} parent=1 // pred_region
      %s757 = ssub.s32 16, 16
      %758 = vsyncadd [#allocation9], %s757
      %s760 = sshll.u32 [#allocation8], 4
      %s761 = int_to_ptr.vmem [resolvable:$true] %s760
      %763 = dma.vmem_to_hbm [thread:$0]  %s761, 16, %s3, [#allocation9]
    $region25: #{tpu_custom_call.1} parent=1 // pred_fallthru
      _
    // Predicated region
    $region26: #{tpu_custom_call.1} parent=1 // pred_check
      _
    $region27: #{tpu_custom_call.1} parent=1 // pred_check_branch
      %765 = sbr.rel (0) target = $region29
    $region28: #{tpu_custom_call.1} parent=1 // pred_region
      %766 = dma.done [#allocation4], 2048
    $region29: #{tpu_custom_call.1} parent=1 // pred_fallthru
      _
    // Predicated region
    $region30: #{tpu_custom_call.1} parent=1 // pred_check
      _
    $region31: #{tpu_custom_call.1} parent=1 // pred_check_branch
      %768 = sbr.rel (0) target = $region33
    $region32: #{tpu_custom_call.1} parent=1 // pred_region
      %769 = dma.done [#allocation9], 16
    $region33: #{tpu_custom_call.1} parent=1 // pred_fallthru
      _
    %770 = vsyncpa [#allocation3], 1
    %771 = vsyncpa [#allocation6], 1
    %772 = vsyncpa [#allocation4], 1
    %773 = vsyncpa [#allocation9], 1

</llo_original>
